<compile_context>
chip_gen: v7x
topology: tpu7x:2x2x1
jax: 0.10.0
libtpu: 0.0.40
codegen_flags: <defaults>
</compile_context>

<pallas_src>
import functools

import jax
import jax.numpy as jnp
from jax import lax
from jax.experimental import pallas as pl
from jax.experimental.pallas import tpu as pltpu


def _coords_to_dm_stats_kernel(coords_ref, target_ref, stats_ref, *, coord_dim):
    """Per-batch-tile sufficient statistics for the normalized-MSE DM loss.

    coords_ref : VMEM (BT, N, D)   coordinates
    target_ref : VMEM (BT, N, N)   target distance matrix
    stats_ref  : VMEM (1, 8, 128)  f32 output block for THIS grid step:
                 sublane 0: sum a^2, 1: sum a*b, 2: sum b^2, 3: max a, 4: max b
                 (a = sqrt(dm + 1e-16) on strict upper tri, b = target there)
    """
    x = coords_ref[...].astype(jnp.float32)   # (BT, N, D)
    t = target_ref[...].astype(jnp.float32)   # (BT, N, N)

    # Exact f32 pairwise squared distances on the VPU (coord_dim is tiny).
    # dm[b, i, j] = sum_d (x[b, i, d] - x[b, j, d])^2
    dm = jnp.zeros(t.shape, dtype=jnp.float32)
    for d in range(coord_dim):                # static unroll, D is 2-3
        cd = x[:, :, d]                       # (BT, N)
        diff = cd[:, :, None] - cd[:, None, :]
        dm = dm + diff * diff

    rs_dist = jnp.sqrt(dm + 1e-16)

    # Strict upper-triangle mask (vectorize_distance_from_DM).
    row = lax.broadcasted_iota(jnp.int32, t.shape, 1)
    col = lax.broadcasted_iota(jnp.int32, t.shape, 2)
    triu = col > row

    a = jnp.where(triu, rs_dist, 0.0)         # predicted distances (masked)
    b = jnp.where(triu, t, 0.0)               # target distances (masked)

    s_aa = jnp.sum(a * a)
    s_ab = jnp.sum(a * b)
    s_bb = jnp.sum(b * b)
    m_a = jnp.max(a)                          # distances are >= 0, so 0-fill is safe
    m_b = jnp.max(b)

    ridx = lax.broadcasted_iota(jnp.int32, (8, 128), 0)
    stats = (jnp.where(ridx == 0, s_aa, 0.0)
             + jnp.where(ridx == 1, s_ab, 0.0)
             + jnp.where(ridx == 2, s_bb, 0.0)
             + jnp.where(ridx == 3, m_a, 0.0)
             + jnp.where(ridx == 4, m_b, 0.0)).astype(jnp.float32)
    stats_ref[...] = stats[None, :, :]


def _pick_batch_tile(batch, bytes_per_sample, target_step_bytes=2 * 1024 * 1024):
    """Largest divisor of `batch` whose per-step input is <= ~target_step_bytes."""
    bt = max(1, min(batch, target_step_bytes // max(1, bytes_per_sample)))
    while batch % bt:
        bt -= 1
    return bt


def coords_to_dm_loss(rs, target, n_points):
    """rs: (B, N*D) coords; target: (B, N*N) distance matrix; returns scalar loss."""
    batch = target.shape[0]
    n = n_points
    d = rs.size // (batch * n)
    coords = rs.reshape(batch, n, d)          # rs.view(batch, N, -1)
    tgt = target.reshape(batch, n, n)         # target.view(batch, N, N)

    itemsize = max(coords.dtype.itemsize, tgt.dtype.itemsize)
    bytes_per_sample = (n * n + n * d) * itemsize
    bt = _pick_batch_tile(batch, bytes_per_sample)
    grid = (batch // bt,)

    stats = pl.pallas_call(
        functools.partial(_coords_to_dm_stats_kernel, coord_dim=d),
        out_shape=jax.ShapeDtypeStruct((grid[0], 8, 128), jnp.float32),
        grid=grid,
        in_specs=[
            pl.BlockSpec((bt, n, d), lambda g: (g, 0, 0)),
            pl.BlockSpec((bt, n, n), lambda g: (g, 0, 0)),
        ],
        out_specs=pl.BlockSpec((1, 8, 128), lambda g: (g, 0, 0)),
        compiler_params=pltpu.CompilerParams(
            dimension_semantics=("parallel",),
            vmem_limit_bytes=40 * 1024 * 1024,
        ),
    )(coords, tgt)

    # Tiny (G, 5)-scalar combine in plain JAX (per perf guidance: finalize in
    # the wrapper so the grid axis stays fully parallel).
    col0 = stats[:, :, 0]                     # (G, 8)
    s_aa = jnp.sum(col0[:, 0])
    s_ab = jnp.sum(col0[:, 1])
    s_bb = jnp.sum(col0[:, 2])
    m_a = jnp.max(col0[:, 3])
    m_b = jnp.max(col0[:, 4])

    n_pairs = batch * n * (n - 1) // 2
    # mean((a/m_a - b/m_b)^2) from sufficient statistics.
    loss = (s_aa / (m_a * m_a)
            - 2.0 * s_ab / (m_a * m_b)
            + s_bb / (m_b * m_b)) / n_pairs
    return loss


def _reference_coords_to_dm_loss(rs, target, n_points):
    """Pure-JAX mirror of the (assumed) PyTorch forward."""
    batch = target.shape[0]
    n = n_points
    x = rs.reshape(batch, n, -1).astype(jnp.float32)
    t = target.reshape(batch, n, n).astype(jnp.float32)
    diff = x[:, :, None, :] - x[:, None, :, :]
    dm = jnp.sum(diff * diff, axis=-1)
    iu, ju = jnp.triu_indices(n, k=1)
    rs_dist = jnp.sqrt(dm[:, iu, ju] + 1e-16)
    t_dist = t[:, iu, ju]
    rs_norm = rs_dist / jnp.max(rs_dist)      # minmax_norm(., dmin=0)
    t_norm = t_dist / jnp.max(t_dist)
    return jnp.mean((rs_norm - t_norm) ** 2)  # MSELoss(reduction='mean')


if __name__ == "__main__":
    key = jax.random.PRNGKey(0)
    k_rs, k_tgt = jax.random.split(key)

    # Small shapes implied by the forward: B=2 samples, N=16 points, D=3 coords.
    B, N, D = 2, 16, 3
    coords = jax.random.normal(k_rs, (B, N, D), dtype=jnp.float32)

    # Target: a ground-truth Euclidean distance matrix from a second point cloud
    # (non-negative, symmetric, zero diagonal) -- what the module expects.
    tc = jax.random.normal(k_tgt, (B, N, D), dtype=jnp.float32)
    tdiff = tc[:, :, None, :] - tc[:, None, :, :]
    target_dm = jnp.sqrt(jnp.sum(tdiff * tdiff, axis=-1))

    rs_in = coords.reshape(B, N * D)          # flat, as the module's .view implies
    target_in = target_dm.reshape(B, N * N)

    loss = coords_to_dm_loss(rs_in, target_in, n_points=N)
    loss = jax.block_until_ready(loss)

    ref = _reference_coords_to_dm_loss(rs_in, target_in, n_points=N)
    assert jnp.allclose(loss, ref, rtol=1e-4, atol=1e-6), (loss, ref)

    print("KERNEL_OK")
</pallas_src>

<mosaic_0001>
module attributes {stable_mosaic.version = 11 : i64} {
  func.func @_coords_to_dm_stats_kernel(%arg0: i32, %arg1: memref<2x16x3xf32, #tpu.memory_space<vmem>>, %arg2: memref<2x16x16xf32, #tpu.memory_space<vmem>>, %arg3: memref<1x8x128xf32, #tpu.memory_space<vmem>>) attributes {dimension_semantics = [#tpu.dimension_semantics<parallel>], iteration_bounds = array<i64: 1>, scalar_prefetch = 0 : i64, scratch_operands = 0 : i64, tpu.core_type = #tpu.core_type<tc>, window_params = [{transform_indices = @transform_0, window_bounds = array<i64: 2, 16, 3>}, {transform_indices = @transform_1, window_bounds = array<i64: 2, 16, 16>}, {transform_indices = @transform_2, window_bounds = array<i64: 1, 8, 128>}]} {
    %c0 = arith.constant 0 : index
    %c0_0 = arith.constant 0 : index
    %c0_1 = arith.constant 0 : index
    %0 = vector.load %arg1[%c0, %c0_0, %c0_1] : memref<2x16x3xf32, #tpu.memory_space<vmem>>, vector<2x16x3xf32>
    %c0_2 = arith.constant 0 : index
    %c0_3 = arith.constant 0 : index
    %c0_4 = arith.constant 0 : index
    %1 = vector.load %arg2[%c0_2, %c0_3, %c0_4] : memref<2x16x16xf32, #tpu.memory_space<vmem>>, vector<2x16x16xf32>
    %cst = arith.constant 0.000000e+00 : f32
    %2 = vector.broadcast %cst : f32 to vector<2x16x16xf32>
    %3 = vector.extract_strided_slice %0 {offsets = [0, 0, 0], sizes = [2, 16, 1], strides = [1, 1, 1]} : vector<2x16x3xf32> to vector<2x16x1xf32>
    %4 = vector.shape_cast %3 : vector<2x16x1xf32> to vector<2x16xf32>
    %5 = vector.shape_cast %4 : vector<2x16xf32> to vector<2x16x1xf32>
    %6 = vector.shape_cast %4 : vector<2x16xf32> to vector<2x1x16xf32>
    %7 = vector.broadcast %5 : vector<2x16x1xf32> to vector<2x16x16xf32>
    %8 = vector.broadcast %6 : vector<2x1x16xf32> to vector<2x16x16xf32>
    %9 = arith.subf %7, %8 : vector<2x16x16xf32>
    %10 = arith.mulf %9, %9 : vector<2x16x16xf32>
    %11 = arith.addf %2, %10 : vector<2x16x16xf32>
    %12 = vector.extract_strided_slice %0 {offsets = [0, 0, 1], sizes = [2, 16, 1], strides = [1, 1, 1]} : vector<2x16x3xf32> to vector<2x16x1xf32>
    %13 = vector.shape_cast %12 : vector<2x16x1xf32> to vector<2x16xf32>
    %14 = vector.shape_cast %13 : vector<2x16xf32> to vector<2x16x1xf32>
    %15 = vector.shape_cast %13 : vector<2x16xf32> to vector<2x1x16xf32>
    %16 = vector.broadcast %14 : vector<2x16x1xf32> to vector<2x16x16xf32>
    %17 = vector.broadcast %15 : vector<2x1x16xf32> to vector<2x16x16xf32>
    %18 = arith.subf %16, %17 : vector<2x16x16xf32>
    %19 = arith.mulf %18, %18 : vector<2x16x16xf32>
    %20 = arith.addf %11, %19 : vector<2x16x16xf32>
    %21 = vector.extract_strided_slice %0 {offsets = [0, 0, 2], sizes = [2, 16, 1], strides = [1, 1, 1]} : vector<2x16x3xf32> to vector<2x16x1xf32>
    %22 = vector.shape_cast %21 : vector<2x16x1xf32> to vector<2x16xf32>
    %23 = vector.shape_cast %22 : vector<2x16xf32> to vector<2x16x1xf32>
    %24 = vector.shape_cast %22 : vector<2x16xf32> to vector<2x1x16xf32>
    %25 = vector.broadcast %23 : vector<2x16x1xf32> to vector<2x16x16xf32>
    %26 = vector.broadcast %24 : vector<2x1x16xf32> to vector<2x16x16xf32>
    %27 = arith.subf %25, %26 : vector<2x16x16xf32>
    %28 = arith.mulf %27, %27 : vector<2x16x16xf32>
    %29 = arith.addf %20, %28 : vector<2x16x16xf32>
    %cst_5 = arith.constant 1.000000e-16 : f32
    %30 = vector.broadcast %cst_5 : f32 to vector<2x16x16xf32>
    %31 = arith.addf %29, %30 : vector<2x16x16xf32>
    %32 = math.sqrt %31 : vector<2x16x16xf32>
    %33 = tpu.iota {dimensions = array<i32: 1>} : vector<2x16x16xi32>
    %34 = tpu.iota {dimensions = array<i32: 2>} : vector<2x16x16xi32>
    %35 = arith.cmpi sgt, %34, %33 : vector<2x16x16xi32>
    %cst_6 = arith.constant 0.000000e+00 : f32
    %36 = vector.broadcast %cst_6 : f32 to vector<2x16x16xf32>
    %37 = arith.select %35, %32, %36 : vector<2x16x16xi1>, vector<2x16x16xf32>
    %cst_7 = arith.constant 0.000000e+00 : f32
    %38 = vector.broadcast %cst_7 : f32 to vector<2x16x16xf32>
    %39 = arith.select %35, %1, %38 : vector<2x16x16xi1>, vector<2x16x16xf32>
    %40 = arith.mulf %37, %37 : vector<2x16x16xf32>
    %41 = vector.shape_cast %40 : vector<2x16x16xf32> to vector<1x2x16x16xf32>
    %cst_8 = arith.constant dense<0.000000e+00> : vector<1xf32>
    %42 = vector.multi_reduction <add>, %41, %cst_8 [1, 2, 3] : vector<1x2x16x16xf32> to vector<1xf32>
    %43 = vector.shape_cast %42 : vector<1xf32> to vector<1x1x1x1xf32>
    %44 = vector.extract %43[0, 0, 0, 0] : f32 from vector<1x1x1x1xf32>
    %45 = arith.mulf %37, %39 : vector<2x16x16xf32>
    %46 = vector.shape_cast %45 : vector<2x16x16xf32> to vector<1x2x16x16xf32>
    %cst_9 = arith.constant dense<0.000000e+00> : vector<1xf32>
    %47 = vector.multi_reduction <add>, %46, %cst_9 [1, 2, 3] : vector<1x2x16x16xf32> to vector<1xf32>
    %48 = vector.shape_cast %47 : vector<1xf32> to vector<1x1x1x1xf32>
    %49 = vector.extract %48[0, 0, 0, 0] : f32 from vector<1x1x1x1xf32>
    %50 = arith.mulf %39, %39 : vector<2x16x16xf32>
    %51 = vector.shape_cast %50 : vector<2x16x16xf32> to vector<1x2x16x16xf32>
    %cst_10 = arith.constant dense<0.000000e+00> : vector<1xf32>
    %52 = vector.multi_reduction <add>, %51, %cst_10 [1, 2, 3] : vector<1x2x16x16xf32> to vector<1xf32>
    %53 = vector.shape_cast %52 : vector<1xf32> to vector<1x1x1x1xf32>
    %54 = vector.extract %53[0, 0, 0, 0] : f32 from vector<1x1x1x1xf32>
    %55 = vector.shape_cast %37 : vector<2x16x16xf32> to vector<1x2x16x16xf32>
    %cst_11 = arith.constant dense<0xFF800000> : vector<1xf32>
    %56 = vector.multi_reduction <maximumf>, %55, %cst_11 [1, 2, 3] : vector<1x2x16x16xf32> to vector<1xf32>
    %57 = vector.shape_cast %56 : vector<1xf32> to vector<1x1x1x1xf32>
    %58 = vector.extract %57[0, 0, 0, 0] : f32 from vector<1x1x1x1xf32>
    %59 = vector.shape_cast %39 : vector<2x16x16xf32> to vector<1x2x16x16xf32>
    %cst_12 = arith.constant dense<0xFF800000> : vector<1xf32>
    %60 = vector.multi_reduction <maximumf>, %59, %cst_12 [1, 2, 3] : vector<1x2x16x16xf32> to vector<1xf32>
    %61 = vector.shape_cast %60 : vector<1xf32> to vector<1x1x1x1xf32>
    %62 = vector.extract %61[0, 0, 0, 0] : f32 from vector<1x1x1x1xf32>
    %63 = tpu.iota {dimensions = array<i32: 0>} : vector<8x128xi32>
    %c0_i32 = arith.constant 0 : i32
    %64 = vector.broadcast %c0_i32 : i32 to vector<8x128xi32>
    %65 = arith.cmpi eq, %63, %64 : vector<8x128xi32>
    %cst_13 = arith.constant 0.000000e+00 : f32
    %66 = vector.broadcast %44 : f32 to vector<8x128xf32>
    %67 = vector.broadcast %cst_13 : f32 to vector<8x128xf32>
    %68 = arith.select %65, %66, %67 : vector<8x128xi1>, vector<8x128xf32>
    %c1_i32 = arith.constant 1 : i32
    %69 = vector.broadcast %c1_i32 : i32 to vector<8x128xi32>
    %70 = arith.cmpi eq, %63, %69 : vector<8x128xi32>
    %cst_14 = arith.constant 0.000000e+00 : f32
    %71 = vector.broadcast %49 : f32 to vector<8x128xf32>
    %72 = vector.broadcast %cst_14 : f32 to vector<8x128xf32>
    %73 = arith.select %70, %71, %72 : vector<8x128xi1>, vector<8x128xf32>
    %74 = arith.addf %68, %73 : vector<8x128xf32>
    %c2_i32 = arith.constant 2 : i32
    %75 = vector.broadcast %c2_i32 : i32 to vector<8x128xi32>
    %76 = arith.cmpi eq, %63, %75 : vector<8x128xi32>
    %cst_15 = arith.constant 0.000000e+00 : f32
    %77 = vector.broadcast %54 : f32 to vector<8x128xf32>
    %78 = vector.broadcast %cst_15 : f32 to vector<8x128xf32>
    %79 = arith.select %76, %77, %78 : vector<8x128xi1>, vector<8x128xf32>
    %80 = arith.addf %74, %79 : vector<8x128xf32>
    %c3_i32 = arith.constant 3 : i32
    %81 = vector.broadcast %c3_i32 : i32 to vector<8x128xi32>
    %82 = arith.cmpi eq, %63, %81 : vector<8x128xi32>
    %cst_16 = arith.constant 0.000000e+00 : f32
    %83 = vector.broadcast %58 : f32 to vector<8x128xf32>
    %84 = vector.broadcast %cst_16 : f32 to vector<8x128xf32>
    %85 = arith.select %82, %83, %84 : vector<8x128xi1>, vector<8x128xf32>
    %86 = arith.addf %80, %85 : vector<8x128xf32>
    %c4_i32 = arith.constant 4 : i32
    %87 = vector.broadcast %c4_i32 : i32 to vector<8x128xi32>
    %88 = arith.cmpi eq, %63, %87 : vector<8x128xi32>
    %cst_17 = arith.constant 0.000000e+00 : f32
    %89 = vector.broadcast %62 : f32 to vector<8x128xf32>
    %90 = vector.broadcast %cst_17 : f32 to vector<8x128xf32>
    %91 = arith.select %88, %89, %90 : vector<8x128xi1>, vector<8x128xf32>
    %92 = arith.addf %86, %91 : vector<8x128xf32>
    %93 = vector.shape_cast %92 : vector<8x128xf32> to vector<1x8x128xf32>
    %c0_18 = arith.constant 0 : index
    %c0_19 = arith.constant 0 : index
    %c0_20 = arith.constant 0 : index
    %94 = vector.load %arg3[%c0_18, %c0_19, %c0_20] : memref<1x8x128xf32, #tpu.memory_space<vmem>>, vector<1x8x128xf32>
    tpu.vector_store %arg3[%c0_18, %c0_19, %c0_20], %93 {strides = array<i32>} : memref<1x8x128xf32, #tpu.memory_space<vmem>>, vector<1x8x128xf32>,
    return
  }
  func.func @transform_0(%arg0: i32) -> (i32, i32, i32) {
    %c0_i32 = arith.constant 0 : i32
    %c0_i32_0 = arith.constant 0 : i32
    %c0_i32_1 = arith.constant 0 : i32
    return %arg0, %c0_i32, %c0_i32_0 : i32, i32, i32
  }
  func.func @transform_1(%arg0: i32) -> (i32, i32, i32) {
    %c0_i32 = arith.constant 0 : i32
    %c0_i32_0 = arith.constant 0 : i32
    %c0_i32_1 = arith.constant 0 : i32
    return %arg0, %c0_i32, %c0_i32_0 : i32, i32, i32
  }
  func.func @transform_2(%arg0: i32) -> (i32, i32, i32) {
    %c0_i32 = arith.constant 0 : i32
    %c0_i32_0 = arith.constant 0 : i32
    %c0_i32_1 = arith.constant 0 : i32
    return %arg0, %c0_i32, %c0_i32_0 : i32, i32, i32
  }
}

</mosaic_0001>

<llo_original>
// kernel: tpu_custom_call.1
$region0: #{tpu_custom_call.1}
  #allocation0 [shape = 'u32[]', space=smem, size = 0x4, offset = 0x4, fixed_abs, tag = 'smem constant byte address 0x4 - core index']
  #allocation1 [shape = 'u32[144,128]{1,0:T(1,128)}', space=vmem, size = 0x12000, scoped, tag = 'internal scratch']
  %s0 = inlined_call_operand.vmem [shape: f32[2,16,3], index: 0, kind: input, shape index: {}]
  %s1 = inlined_call_operand.vmem [shape: f32[2,16,16], index: 1, kind: input, shape index: {}]
  %s2 = inlined_call_operand.hbm [shape: f32[1,8,128], index: 2, kind: output, shape index: {}]
  %s3 = sld [smem:[#allocation0]]
  $region18: #{tpu_custom_call.1} parent=0
    _
  %s5 = ssub.s32 1, %s3
  %s6 = scalar_select 0, %s5, %s3
  $region1: #{tpu_custom_call.1} parent=0
    #allocation2 [shape = 'u8[4096]{0}', space=vmem, size = 0x1000, scoped, tag = 'output window, operand 0, single buffered']
    #allocation3 [shape = 's32[1]{0}', space=sflag, size = 0x4, scoped, tag = 'scoped memory for tpu_custom_call.1']
    %7 = vsyncpa [#allocation3], 0
    // Predicated region
    $region2: #{tpu_custom_call.1} parent=1 // pred_check
      _
    $region3: #{tpu_custom_call.1} parent=1 // pred_check_branch
      %9 = sbr.rel (0) target = $region5
    $region4: #{tpu_custom_call.1} parent=1 // pred_region
      _
    $region5: #{tpu_custom_call.1} parent=1 // pred_fallthru
      _
    // Predicated region
    $region6: #{tpu_custom_call.1} parent=1 // pred_check
      _
    $region7: #{tpu_custom_call.1} parent=1 // pred_check_branch
      %11 = sbr.rel (0) target = $region9
    $region8: #{tpu_custom_call.1} parent=1 // pred_region
      _
    $region9: #{tpu_custom_call.1} parent=1 // pred_fallthru
      _
    %v12 = vld [vmem:[%s0] sm:$0xff]
    %v13 = vld [vmem:[%s0 + $0x8] sm:$0xff]
    %v14 = vld [vmem:[%s0 + $0x10] sm:$0xff]
    %v15 = vld [vmem:[%s0 + $0x18] sm:$0xff]
    %v16 = vld [vmem:[%s1] sm:$0xff]
    %v17 = vld [vmem:[%s1 + $0x8] sm:$0xff]
    %v18 = vld [vmem:[%s1 + $0x10] sm:$0xff]
    %v19 = vld [vmem:[%s1 + $0x18] sm:$0xff]
    %21 = vset.pattern.permute.xlu0 0
    %22 = vperm.xlu0 %21, %v12
    %v23 = vpop.permute.xlu0 %22
    %26 = vset.pattern.permute.xlu0 0
    %27 = vperm.xlu0 %26, %v13
    %v28 = vpop.permute.xlu0 %27
    %31 = vset.pattern.permute.xlu0 0
    %32 = vperm.xlu0 %31, %v14
    %v33 = vpop.permute.xlu0 %32
    %36 = vset.pattern.permute.xlu0 0
    %37 = vperm.xlu0 %36, %v15
    %v38 = vpop.permute.xlu0 %37
    %v40 = vlaneseq
    %v41 = vand.u32 %v40, 127
    %v42 = vlaneseq
    %v43 = vshrl.u32 %v42, 7
    %v44 = vsub.s32 %v41, %v43
    %v45 = vrot.slane %v23, %v44
    %v46 = vadd.s32 %v41, 4294967288
    %v47 = vlaneseq
    %v48 = vshrl.u32 %v47, 7
    %v49 = vsub.s32 %v46, %v48
    %v50 = vrot.slane %v28, %v49
    %vm51 = vcmask 130112
    %v52 = vsel %vm51, %v50, %v45
    %v53 = vlaneseq
    %v54 = vshrl.u32 %v53, 7
    %v55 = vsub.s32 %v41, %v54
    %v56 = vrot.slane %v33, %v55
    %v57 = vlaneseq
    %v58 = vshrl.u32 %v57, 7
    %v59 = vsub.s32 %v46, %v58
    %v60 = vrot.slane %v38, %v59
    %v61 = vsel %vm51, %v60, %v56
    %vm62 = vcmask 1042434
    %v63 = vsel %vm62, %v52, %v52
    %vm64 = vcmask 1043459
    %v65 = vsel %vm64, %v52, %v63
    %vm66 = vcmask 1044484
    %v67 = vsel %vm66, %v52, %v65
    %vm68 = vcmask 1045509
    %v69 = vsel %vm68, %v52, %v67
    %vm70 = vcmask 1046534
    %v71 = vsel %vm70, %v52, %v69
    %vm72 = vcmask 1047559
    %v73 = vsel %vm72, %v52, %v71
    %v74 = vsel %vm62, %v61, %v61
    %v75 = vsel %vm64, %v61, %v74
    %v76 = vsel %vm66, %v61, %v75
    %v77 = vsel %vm68, %v61, %v76
    %v78 = vsel %vm70, %v61, %v77
    %v79 = vsel %vm72, %v61, %v78
    %v82 = vsub.f32 %v23, %v73
    %v83 = vsub.f32 %v28, %v73
    %v84 = vsub.f32 %v33, %v79
    %v85 = vsub.f32 %v38, %v79
    %v86 = vmul.f32 %v82, %v82
    %v87 = vmul.f32 %v83, %v83
    %v88 = vmul.f32 %v84, %v84
    %v89 = vmul.f32 %v85, %v85
    %v90 = vadd.f32 %v86, 0.0
    %v91 = vadd.f32 %v87, 0.0
    %v92 = vadd.f32 %v88, 0.0
    %v93 = vadd.f32 %v89, 0.0
    %94 = vset.pattern.permute.xlu0 1
    %95 = vperm.xlu0 %94, %v12
    %v96 = vpop.permute.xlu0 %95
    %98 = vset.pattern.permute.xlu0 1
    %99 = vperm.xlu0 %98, %v13
    %v100 = vpop.permute.xlu0 %99
    %102 = vset.pattern.permute.xlu0 1
    %103 = vperm.xlu0 %102, %v14
    %v104 = vpop.permute.xlu0 %103
    %106 = vset.pattern.permute.xlu0 1
    %107 = vperm.xlu0 %106, %v15
    %v108 = vpop.permute.xlu0 %107
    %v110 = vlaneseq
    %v111 = vshrl.u32 %v110, 7
    %v112 = vsub.s32 %v41, %v111
    %v113 = vrot.slane %v96, %v112
    %v114 = vlaneseq
    %v115 = vshrl.u32 %v114, 7
    %v116 = vsub.s32 %v46, %v115
    %v117 = vrot.slane %v100, %v116
    %v118 = vsel %vm51, %v117, %v113
    %v119 = vlaneseq
    %v120 = vshrl.u32 %v119, 7
    %v121 = vsub.s32 %v41, %v120
    %v122 = vrot.slane %v104, %v121
    %v123 = vlaneseq
    %v124 = vshrl.u32 %v123, 7
    %v125 = vsub.s32 %v46, %v124
    %v126 = vrot.slane %v108, %v125
    %v127 = vsel %vm51, %v126, %v122
    %v128 = vsel %vm62, %v118, %v118
    %v129 = vsel %vm64, %v118, %v128
    %v130 = vsel %vm66, %v118, %v129
    %v131 = vsel %vm68, %v118, %v130
    %v132 = vsel %vm70, %v118, %v131
    %v133 = vsel %vm72, %v118, %v132
    %v134 = vsel %vm62, %v127, %v127
    %v135 = vsel %vm64, %v127, %v134
    %v136 = vsel %vm66, %v127, %v135
    %v137 = vsel %vm68, %v127, %v136
    %v138 = vsel %vm70, %v127, %v137
    %v139 = vsel %vm72, %v127, %v138
    %v142 = vsub.f32 %v96, %v133
    %v143 = vsub.f32 %v100, %v133
    %v144 = vsub.f32 %v104, %v139
    %v145 = vsub.f32 %v108, %v139
    %v146 = vmul.f32 %v142, %v142
    %v147 = vmul.f32 %v143, %v143
    %v148 = vmul.f32 %v144, %v144
    %v149 = vmul.f32 %v145, %v145
    %v150 = vadd.f32 %v90, %v146
    %v151 = vadd.f32 %v91, %v147
    %v152 = vadd.f32 %v92, %v148
    %v153 = vadd.f32 %v93, %v149
    %154 = vset.pattern.permute.xlu0 2
    %155 = vperm.xlu0 %154, %v12
    %v156 = vpop.permute.xlu0 %155
    %158 = vset.pattern.permute.xlu0 2
    %159 = vperm.xlu0 %158, %v13
    %v160 = vpop.permute.xlu0 %159
    %162 = vset.pattern.permute.xlu0 2
    %163 = vperm.xlu0 %162, %v14
    %v164 = vpop.permute.xlu0 %163
    %166 = vset.pattern.permute.xlu0 2
    %167 = vperm.xlu0 %166, %v15
    %v168 = vpop.permute.xlu0 %167
    %v170 = vlaneseq
    %v171 = vshrl.u32 %v170, 7
    %v172 = vsub.s32 %v41, %v171
    %v173 = vrot.slane %v156, %v172
    %v174 = vlaneseq
    %v175 = vshrl.u32 %v174, 7
    %v176 = vsub.s32 %v46, %v175
    %v177 = vrot.slane %v160, %v176
    %v178 = vsel %vm51, %v177, %v173
    %v179 = vlaneseq
    %v180 = vshrl.u32 %v179, 7
    %v181 = vsub.s32 %v41, %v180
    %v182 = vrot.slane %v164, %v181
    %v183 = vlaneseq
    %v184 = vshrl.u32 %v183, 7
    %v185 = vsub.s32 %v46, %v184
    %v186 = vrot.slane %v168, %v185
    %v187 = vsel %vm51, %v186, %v182
    %v188 = vsel %vm62, %v178, %v178
    %v189 = vsel %vm64, %v178, %v188
    %v190 = vsel %vm66, %v178, %v189
    %v191 = vsel %vm68, %v178, %v190
    %v192 = vsel %vm70, %v178, %v191
    %v193 = vsel %vm72, %v178, %v192
    %v194 = vsel %vm62, %v187, %v187
    %v195 = vsel %vm64, %v187, %v194
    %v196 = vsel %vm66, %v187, %v195
    %v197 = vsel %vm68, %v187, %v196
    %v198 = vsel %vm70, %v187, %v197
    %v199 = vsel %vm72, %v187, %v198
    %v202 = vsub.f32 %v156, %v193
    %v203 = vsub.f32 %v160, %v193
    %v204 = vsub.f32 %v164, %v199
    %v205 = vsub.f32 %v168, %v199
    %v206 = vmul.f32 %v202, %v202
    %v207 = vmul.f32 %v203, %v203
    %v208 = vmul.f32 %v204, %v204
    %v209 = vmul.f32 %v205, %v205
    %v210 = vadd.f32 %v150, %v206
    %v211 = vadd.f32 %v151, %v207
    %v212 = vadd.f32 %v152, %v208
    %v213 = vadd.f32 %v153, %v209
    %v214 = vadd.f32 %v210, 1e-16
    %v215 = vadd.f32 %v211, 1e-16
    %v216 = vadd.f32 %v212, 1e-16
    %v217 = vadd.f32 %v213, 1e-16
    %v218 = vrsqrt.pop %v214
    %v219 = vmul.f32 %v214, %v218
    %vm220 = vcmp.eq.f32.partialorder %v214, inf
    %v221 = vsel %vm220, %v214, %v219
    %vm222 = vcmp.eq.f32.partialorder %v214, 0.0
    %v223 = vand.u32 %v214, 2147483648
    %v224 = vsel %vm222, %v223, %v221
    %v225 = vrsqrt.pop %v215
    %v226 = vmul.f32 %v215, %v225
    %vm227 = vcmp.eq.f32.partialorder %v215, inf
    %v228 = vsel %vm227, %v215, %v226
    %vm229 = vcmp.eq.f32.partialorder %v215, 0.0
    %v230 = vand.u32 %v215, 2147483648
    %v231 = vsel %vm229, %v230, %v228
    %v232 = vrsqrt.pop %v216
    %v233 = vmul.f32 %v216, %v232
    %vm234 = vcmp.eq.f32.partialorder %v216, inf
    %v235 = vsel %vm234, %v216, %v233
    %vm236 = vcmp.eq.f32.partialorder %v216, 0.0
    %v237 = vand.u32 %v216, 2147483648
    %v238 = vsel %vm236, %v237, %v235
    %v239 = vrsqrt.pop %v217
    %v240 = vmul.f32 %v217, %v239
    %vm241 = vcmp.eq.f32.partialorder %v217, inf
    %v242 = vsel %vm241, %v217, %v240
    %vm243 = vcmp.eq.f32.partialorder %v217, 0.0
    %v244 = vand.u32 %v217, 2147483648
    %v245 = vsel %vm243, %v244, %v242
    %v246 = vlaneseq
    %v247 = vshrl.u32 %v246, 7
    %v248 = vadd.s32 %v247, 8
    %vm249 = vcmp.gt.s32.totalorder %v41, %v247
    %vm250 = vcmp.gt.s32.totalorder %v41, %v248
    %v251 = vsel %vm249, %v224, 0.0
    %v252 = vsel %vm250, %v231, 0.0
    %v253 = vsel %vm249, %v238, 0.0
    %v254 = vsel %vm250, %v245, 0.0
    %v255 = vsel %vm249, %v16, 0.0
    %v256 = vsel %vm250, %v17, 0.0
    %v257 = vsel %vm249, %v18, 0.0
    %v258 = vsel %vm250, %v19, 0.0
    %v259 = vmul.f32 %v251, %v251
    %v260 = vmul.f32 %v252, %v252
    %v261 = vmul.f32 %v253, %v253
    %v262 = vmul.f32 %v254, %v254
    %vm263 = vcmask 130048
    %v264 = vsel %vm263, %v259, 0.0
    %v265 = vsel %vm263, %v260, 0.0
    %v266 = vadd.f32 %v264, %v265
    %v267 = vsel %vm263, %v261, 0.0
    %v268 = vadd.f32 %v266, %v267
    %v269 = vsel %vm263, %v262, 0.0
    %v270 = vadd.f32 %v268, %v269
    %271 = vadd.xlane.f32.xlu0 %v270
    %v272 = vpop.xlane.xlu0 %271
    %v273 = vrot.slane %v272, 4
    %v274 = vadd.f32 %v272, %v273
    %v275 = vrot.slane %v274, 2
    %v276 = vadd.f32 %v274, %v275
    %v277 = vrot.slane %v276, 1
    %v278 = vadd.f32 %v276, %v277
    %s279 = vtos %v278
    %v280 = vmul.f32 %v251, %v255
    %v281 = vmul.f32 %v252, %v256
    %v282 = vmul.f32 %v253, %v257
    %v283 = vmul.f32 %v254, %v258
    %v284 = vsel %vm263, %v280, 0.0
    %v285 = vsel %vm263, %v281, 0.0
    %v286 = vadd.f32 %v284, %v285
    %v287 = vsel %vm263, %v282, 0.0
    %v288 = vadd.f32 %v286, %v287
    %v289 = vsel %vm263, %v283, 0.0
    %v290 = vadd.f32 %v288, %v289
    %291 = vadd.xlane.f32.xlu0 %v290
    %v292 = vpop.xlane.xlu0 %291
    %v293 = vrot.slane %v292, 4
    %v294 = vadd.f32 %v292, %v293
    %v295 = vrot.slane %v294, 2
    %v296 = vadd.f32 %v294, %v295
    %v297 = vrot.slane %v296, 1
    %v298 = vadd.f32 %v296, %v297
    %s299 = vtos %v298
    %v300 = vmul.f32 %v255, %v255
    %v301 = vmul.f32 %v256, %v256
    %v302 = vmul.f32 %v257, %v257
    %v303 = vmul.f32 %v258, %v258
    %v304 = vsel %vm263, %v300, 0.0
    %v305 = vsel %vm263, %v301, 0.0
    %v306 = vadd.f32 %v304, %v305
    %v307 = vsel %vm263, %v302, 0.0
    %v308 = vadd.f32 %v306, %v307
    %v309 = vsel %vm263, %v303, 0.0
    %v310 = vadd.f32 %v308, %v309
    %311 = vadd.xlane.f32.xlu0 %v310
    %v312 = vpop.xlane.xlu0 %311
    %v313 = vrot.slane %v312, 4
    %v314 = vadd.f32 %v312, %v313
    %v315 = vrot.slane %v314, 2
    %v316 = vadd.f32 %v314, %v315
    %v317 = vrot.slane %v316, 1
    %v318 = vadd.f32 %v316, %v317
    %s319 = vtos %v318
    %v320 = vsel %vm263, %v251, -inf
    %v321 = vsel %vm263, %v252, -inf
    %v322 = vsel %vm263, %v253, -inf
    %v323 = vsel %vm263, %v254, -inf
    %v324 = vmax.f32 %v320, %v321
    %v325 = vmax.f32 %v322, %v323
    %v326 = vmax.f32 %v324, %v325
    %327 = vmax.xlane.f32.xlu0 %v326
    %v328 = vpop.xlane.xlu0 %327
    %v329 = vrot.slane %v328, 4
    %v330 = vmax.f32 %v328, %v329
    %v331 = vrot.slane %v330, 2
    %v332 = vmax.f32 %v330, %v331
    %v333 = vrot.slane %v332, 1
    %v334 = vmax.f32 %v332, %v333
    %s335 = vtos %v334
    %v336 = vsel %vm263, %v255, -inf
    %v337 = vsel %vm263, %v256, -inf
    %v338 = vsel %vm263, %v257, -inf
    %v339 = vsel %vm263, %v258, -inf
    %v340 = vmax.f32 %v336, %v337
    %v341 = vmax.f32 %v338, %v339
    %v342 = vmax.f32 %v340, %v341
    %343 = vmax.xlane.f32.xlu0 %v342
    %v344 = vpop.xlane.xlu0 %343
    %v345 = vrot.slane %v344, 4
    %v346 = vmax.f32 %v344, %v345
    %v347 = vrot.slane %v346, 2
    %v348 = vmax.f32 %v346, %v347
    %v349 = vrot.slane %v348, 1
    %v350 = vmax.f32 %v348, %v349
    %s351 = vtos %v350
    %vm352 = vcmp.eq.s32.totalorder %v247, 0
    %v353 = vstv %s279
    %v354 = vsel %vm352, %v353, 0.0
    %vm355 = vcmp.eq.s32.totalorder %v247, 1
    %v356 = vstv %s299
    %v357 = vsel %vm355, %v356, 0.0
    %v358 = vadd.f32 %v354, %v357
    %vm359 = vcmp.eq.s32.totalorder %v247, 2
    %v360 = vstv %s319
    %v361 = vsel %vm359, %v360, 0.0
    %v362 = vadd.f32 %v358, %v361
    %vm363 = vcmp.eq.s32.totalorder %v247, 3
    %v364 = vstv %s335
    %v365 = vsel %vm363, %v364, 0.0
    %v366 = vadd.f32 %v362, %v365
    %vm367 = vcmp.eq.s32.totalorder %v247, 4
    %v368 = vstv %s351
    %v369 = vsel %vm367, %v368, 0.0
    %v370 = vadd.f32 %v366, %v369
    %371 = vst [vmem:[#allocation2] sm:$0xff] %v370
    // Predicated region
    $region10: #{tpu_custom_call.1} parent=1 // pred_check
      _
    $region11: #{tpu_custom_call.1} parent=1 // pred_check_branch
      %373 = sbr.rel (0) target = $region13
    $region12: #{tpu_custom_call.1} parent=1 // pred_region
      %s375 = ssub.s32 128, 128
      %376 = vsyncadd [#allocation3], %s375
      %s378 = sshll.u32 [#allocation2], 4
      %s379 = int_to_ptr.vmem [resolvable:$true] %s378
      %381 = dma.vmem_to_hbm [thread:$0]  %s379, 128, %s2, [#allocation3]
    $region13: #{tpu_custom_call.1} parent=1 // pred_fallthru
      _
    // Predicated region
    $region14: #{tpu_custom_call.1} parent=1 // pred_check
      _
    $region15: #{tpu_custom_call.1} parent=1 // pred_check_branch
      %383 = sbr.rel (0) target = $region17
    $region16: #{tpu_custom_call.1} parent=1 // pred_region
      %384 = dma.done [#allocation3], 128
    $region17: #{tpu_custom_call.1} parent=1 // pred_fallthru
      _
    %385 = vsyncpa [#allocation3], 1

</llo_original>
